<compile_context>
chip_gen: v7x
topology: tpu7x:2x2x1
jax: 0.10.0
libtpu: 0.0.40
codegen_flags: <defaults>
</compile_context>

<pallas_src>
import numpy as np
import jax
import jax.numpy as jnp
from jax.experimental import pallas as pl
from jax.experimental.pallas import tpu as pltpu


# --------------------------------------------------------------------------
# Kernel
# --------------------------------------------------------------------------
def _copy_tile_kernel(x_ref, o_ref):
    # x_ref / o_ref: (C, TR, W).  The crop is expressed purely via the grid /
    # BlockSpec, so the body is an unmasked, lane-dense (full-width) VMEM
    # copy: no slicing, no cross-lane work.
    o_ref[...] = x_ref[...]


# --------------------------------------------------------------------------
# Tiling helpers
# --------------------------------------------------------------------------
def _cdiv(a: int, b: int) -> int:
    return -(-a // b)


def _sublane_multiple(itemsize: int) -> int:
    # Sub-32-bit dtypes pack along sublanes: min row-tile of 8 (32-bit),
    # 16 (bf16/f16), 32 (int8/uint8/fp8).
    return max(8, 32 // max(itemsize, 1))


def _pick_row_tile(rows: int, bytes_per_row: int, sublane: int,
                   max_block_bytes: int, *, min_tiles: int = 2,
                   split_threshold: int = 2 << 20) -> int:
    """Sublane-aligned row-tile size for the cropped region.

    * As many rows as fit the per-block byte budget (no divisor requirement;
      the grid uses cdiv and Pallas masks the partial last block).
    * Never more rows than the crop itself (rounded up to the sublane pack).
    * Large crops that would otherwise be a single grid step are split into
      at least `min_tiles` so the "parallel" grid axis can shard across
      TensorCores (v7x megacore) -- small crops stay single-step to avoid
      paying the ~0.35 us fixed per-step overhead twice for nothing.
    """
    cap = (max_block_bytes // max(bytes_per_row, 1)) // sublane * sublane
    cap = max(sublane, cap)
    tr = min(cap, _cdiv(rows, sublane) * sublane)
    if tr >= rows and rows * bytes_per_row > split_threshold:
        split = _cdiv(_cdiv(rows, min_tiles), sublane) * sublane
        tr = max(sublane, min(tr, split))
    return tr


# --------------------------------------------------------------------------
# Wrapper
# --------------------------------------------------------------------------
def crop_top_square(image: jax.Array, *,
                    max_block_bytes: int = 6 << 20,
                    vmem_limit_bytes: int = 32 << 20) -> jax.Array:
    """Pallas implementation of CropTopSquare.forward.  image: (C, H, W)."""
    c, h, w = image.shape

    if h <= w:
        # PyTorch module returns the input tensor unchanged: identity,
        # zero data movement, so no kernel is launched.
        return image

    itemsize = np.dtype(image.dtype).itemsize
    sublane = _sublane_multiple(itemsize)
    bytes_per_row = c * w * itemsize
    tr = _pick_row_tile(w, bytes_per_row, sublane, max_block_bytes)
    n_tiles = _cdiv(w, tr)

    # Blocks: (C, tr, W).  Last dim equals the full width of both input and
    # output arrays; tr is a multiple of the dtype's sublane pack, so both
    # the interior and the (masked) partial last block are legal.  Rows of
    # the input beyond w that land inside the last input block are read but
    # never written (output writes are masked to the (C, w, w) bounds).
    return pl.pallas_call(
        _copy_tile_kernel,
        out_shape=jax.ShapeDtypeStruct((c, w, w), image.dtype),
        grid=(n_tiles,),
        in_specs=[pl.BlockSpec((c, tr, w), lambda r: (0, r, 0))],
        out_specs=pl.BlockSpec((c, tr, w), lambda r: (0, r, 0)),
        compiler_params=pltpu.CompilerParams(
            dimension_semantics=("parallel",),
            vmem_limit_bytes=vmem_limit_bytes),
    )(image)


# --------------------------------------------------------------------------
# Demo / correctness check
# --------------------------------------------------------------------------
if __name__ == "__main__":
    key = jax.random.PRNGKey(0)
    k1, k2, k3, k4, k5, k6 = jax.random.split(key, 6)

    # tall, width multiple of 8 (f32)            -> exact single-tile copy
    x_tall = jax.random.uniform(k1, (3, 24, 16), dtype=jnp.float32)
    # tall, width NOT multiple of 8 (f32)        -> partial (masked) block
    x_odd = jax.random.uniform(k2, (3, 20, 12), dtype=jnp.float32)
    # wide (h <= w)                              -> identity branch
    x_wide = jax.random.uniform(k3, (3, 16, 24), dtype=jnp.float32)
    # tall bf16, unaligned width                 -> 16-row sublane packing
    x_bf16 = jax.random.uniform(k4, (3, 30, 20), dtype=jnp.float32
                                ).astype(jnp.bfloat16)
    # tall uint8, unaligned width                -> 32-row sublane packing
    x_u8 = jax.random.randint(k5, (3, 72, 40), 0, 256,
                              dtype=jnp.int32).astype(jnp.uint8)
    # multi-tile grid with partial last tile (tiny block budget forces tiling)
    x_mt = jax.random.uniform(k6, (3, 80, 52), dtype=jnp.float32)

    y_tall = jax.block_until_ready(crop_top_square(x_tall))
    y_odd = jax.block_until_ready(crop_top_square(x_odd))
    y_wide = jax.block_until_ready(crop_top_square(x_wide))
    y_bf16 = jax.block_until_ready(crop_top_square(x_bf16))
    y_u8 = jax.block_until_ready(crop_top_square(x_u8))
    y_mt = jax.block_until_ready(crop_top_square(x_mt, max_block_bytes=4096))

    assert y_tall.shape == (3, 16, 16), y_tall.shape
    assert y_odd.shape == (3, 12, 12), y_odd.shape
    assert y_wide.shape == (3, 16, 24), y_wide.shape
    assert y_bf16.shape == (3, 20, 20), y_bf16.shape
    assert y_u8.shape == (3, 40, 40), y_u8.shape
    assert y_mt.shape == (3, 52, 52), y_mt.shape

    np.testing.assert_array_equal(np.asarray(y_tall),
                                  np.asarray(x_tall[:, :16, :]))
    np.testing.assert_array_equal(np.asarray(y_odd),
                                  np.asarray(x_odd[:, :12, :]))
    np.testing.assert_array_equal(np.asarray(y_wide), np.asarray(x_wide))
    np.testing.assert_array_equal(
        np.asarray(y_bf16.astype(jnp.float32)),
        np.asarray(x_bf16[:, :20, :].astype(jnp.float32)))
    np.testing.assert_array_equal(np.asarray(y_u8),
                                  np.asarray(x_u8[:, :40, :]))
    np.testing.assert_array_equal(np.asarray(y_mt),
                                  np.asarray(x_mt[:, :52, :]))

    print("KERNEL_OK")
</pallas_src>

<mosaic_0001>
module attributes {stable_mosaic.version = 11 : i64} {
  func.func @_copy_tile_kernel(%arg0: i32, %arg1: memref<3x16x16xf32, #tpu.memory_space<vmem>>, %arg2: memref<3x16x16xf32, #tpu.memory_space<vmem>>) attributes {dimension_semantics = [#tpu.dimension_semantics<parallel>], iteration_bounds = array<i64: 1>, scalar_prefetch = 0 : i64, scratch_operands = 0 : i64, tpu.core_type = #tpu.core_type<tc>, window_params = [{transform_indices = @transform_0, window_bounds = array<i64: 3, 16, 16>}, {transform_indices = @transform_1, window_bounds = array<i64: 3, 16, 16>}]} {
    %c0 = arith.constant 0 : index
    %c0_0 = arith.constant 0 : index
    %c0_1 = arith.constant 0 : index
    %0 = vector.load %arg1[%c0, %c0_0, %c0_1] : memref<3x16x16xf32, #tpu.memory_space<vmem>>, vector<3x16x16xf32>
    %c0_2 = arith.constant 0 : index
    %c0_3 = arith.constant 0 : index
    %c0_4 = arith.constant 0 : index
    %1 = vector.load %arg2[%c0_2, %c0_3, %c0_4] : memref<3x16x16xf32, #tpu.memory_space<vmem>>, vector<3x16x16xf32>
    tpu.vector_store %arg2[%c0_2, %c0_3, %c0_4], %0 {strides = array<i32>} : memref<3x16x16xf32, #tpu.memory_space<vmem>>, vector<3x16x16xf32>,
    return
  }
  func.func @transform_0(%arg0: i32) -> (i32, i32, i32) {
    %c0_i32 = arith.constant 0 : i32
    %c0_i32_0 = arith.constant 0 : i32
    %c0_i32_1 = arith.constant 0 : i32
    return %c0_i32, %arg0, %c0_i32_0 : i32, i32, i32
  }
  func.func @transform_1(%arg0: i32) -> (i32, i32, i32) {
    %c0_i32 = arith.constant 0 : i32
    %c0_i32_0 = arith.constant 0 : i32
    %c0_i32_1 = arith.constant 0 : i32
    return %c0_i32, %arg0, %c0_i32_0 : i32, i32, i32
  }
}

</mosaic_0001>

<llo_original>
// kernel: tpu_custom_call.1
$region0: #{tpu_custom_call.1}
  #allocation0 [shape = 'u32[]', space=smem, size = 0x4, offset = 0x4, fixed_abs, tag = 'smem constant byte address 0x4 - core index']
  #allocation1 [shape = 'u32[144,128]{1,0:T(1,128)}', space=vmem, size = 0x12000, scoped, tag = 'internal scratch']
  %s0 = inlined_call_operand.vmem [shape: f32[3,24,16], index: 0, kind: input, shape index: {}]
  %s1 = inlined_call_operand.hbm [shape: f32[3,16,16], index: 1, kind: output, shape index: {}]
  %s2 = sld [smem:[#allocation0]]
  $region52: #{tpu_custom_call.1} parent=0
    _
  %s4 = ssub.s32 1, %s2
  %s5 = scalar_select 0, %s4, %s2
  $region1: #{tpu_custom_call.1} parent=0
    #allocation2 [shape = 'u8[24576]{0}', space=vmem, size = 0x6000, scoped, tag = 'input window, operand 0, single buffered']
    #allocation3 [shape = 'u8[24576]{0}', space=vmem, size = 0x6000, scoped, tag = 'output window, operand 0, single buffered']
    #allocation4 [shape = 's32[1]{0}', space=sflag, size = 0x4, scoped, tag = 'scoped memory for tpu_custom_call.1']
    %6 = vsyncpa [#allocation4], 0
    // Predicated region
    $region2: #{tpu_custom_call.1} parent=1 // pred_check
      _
    $region3: #{tpu_custom_call.1} parent=1 // pred_check_branch
      %8 = sbr.rel (0) target = $region5
    $region4: #{tpu_custom_call.1} parent=1 // pred_region
      // Predicated region
      $region6: #{tpu_custom_call.1} parent=4 // pred_check
        _
      $region7: #{tpu_custom_call.1} parent=4 // pred_check_branch
        %10 = sbr.rel (0) target = $region9
      $region8: #{tpu_custom_call.1} parent=4 // pred_region
        // Predicated region
        $region10: #{tpu_custom_call.1} parent=8 // pred_check
          _
        $region11: #{tpu_custom_call.1} parent=8 // pred_check_branch
          %12 = sbr.rel (0) target = $region13
        $region12: #{tpu_custom_call.1} parent=8 // pred_region
          // Predicated region
          $region25: #{tpu_custom_call.1} parent=12 // pred_check
            _
          $region26: #{tpu_custom_call.1} parent=12 // pred_check_branch
            %37 = sbr.rel (0) target = $region28
          $region27: #{tpu_custom_call.1} parent=12 // pred_region
            loop: start=0, step=1, limit=1
            $region29: #{tpu_custom_call.1} parent=27 // loop_pre_header
              _
            $region30: #{tpu_custom_call.1} parent=27 // loop_header
              %s39 = sphi 0, %s43
              %p40 = scmp.ge.s32.totalorder %s39, 1
              %s44 = sphi %s0, %s0
              %s45 = sphi [#allocation2], [#allocation2]
            $region31: #{tpu_custom_call.1} parent=27 // loop_header_branch
              %42 = sbr.rel (%p40) target = $region35
            $region32: #{tpu_custom_call.1} parent=27 // loop_body
              %v46 = vld [vmem:[%s44] sm:$0xff]
              %47 = vst [vmem:[%s45] sm:$0xff] %v46
              %v48 = vld [vmem:[%s44 + $0x8] sm:$0xff]
              %49 = vst [vmem:[%s45 + $0x8] sm:$0xff] %v48
              %v50 = vld [vmem:[%s44 + $0x18] sm:$0xff]
              %51 = vst [vmem:[%s45 + $0x10] sm:$0xff] %v50
              %v52 = vld [vmem:[%s44 + $0x20] sm:$0xff]
              %53 = vst [vmem:[%s45 + $0x18] sm:$0xff] %v52
              %v54 = vld [vmem:[%s44 + $0x30] sm:$0xff]
              %55 = vst [vmem:[%s45 + $0x20] sm:$0xff] %v54
              %v56 = vld [vmem:[%s44 + $0x38] sm:$0xff]
              %57 = vst [vmem:[%s45 + $0x28] sm:$0xff] %v56
            $region33: #{tpu_custom_call.1} parent=27 // loop_footer
              %s43 = sadd.s32 1, %s39
            $region34: #{tpu_custom_call.1} parent=27 // loop_footer_branch
              %38 = sbr.rel target = $region30
            $region35: #{tpu_custom_call.1} parent=27 // loop_exit
              _
          $region28: #{tpu_custom_call.1} parent=12 // pred_fallthru
            _
          // Predicated region
          $region36: #{tpu_custom_call.1} parent=12 // pred_check
            _
          $region37: #{tpu_custom_call.1} parent=12 // pred_check_branch
            %59 = sbr.rel target = $region39
          $region38: #{tpu_custom_call.1} parent=12 // pred_region
            _
          $region39: #{tpu_custom_call.1} parent=12 // pred_fallthru
            _
        $region13: #{tpu_custom_call.1} parent=8 // pred_fallthru
          _
        // Predicated region
        $region14: #{tpu_custom_call.1} parent=8 // pred_check
          _
        $region15: #{tpu_custom_call.1} parent=8 // pred_check_branch
          %14 = sbr.rel target = $region17
        $region16: #{tpu_custom_call.1} parent=8 // pred_region
          loop: start=0, step=1, limit=1
          $region18: #{tpu_custom_call.1} parent=16 // loop_pre_header
            _
          $region19: #{tpu_custom_call.1} parent=16 // loop_header
            %s17 = sphi 0, %s21
            %p18 = scmp.ge.s32.totalorder %s17, 1
            %s22 = sphi %s0, %s0
            %s23 = sphi [#allocation2], [#allocation2]
          $region20: #{tpu_custom_call.1} parent=16 // loop_header_branch
            %20 = sbr.rel (%p18) target = $region24
          $region21: #{tpu_custom_call.1} parent=16 // loop_body
            %v24 = vld [vmem:[%s22] sm:$0xff]
            %25 = vst [vmem:[%s23] sm:$0xff] %v24
            %v26 = vld [vmem:[%s22 + $0x8] sm:$0xff]
            %27 = vst [vmem:[%s23 + $0x8] sm:$0xff] %v26
            %v28 = vld [vmem:[%s22 + $0x18] sm:$0xff]
            %29 = vst [vmem:[%s23 + $0x10] sm:$0xff] %v28
            %v30 = vld [vmem:[%s22 + $0x20] sm:$0xff]
            %31 = vst [vmem:[%s23 + $0x18] sm:$0xff] %v30
            %v32 = vld [vmem:[%s22 + $0x30] sm:$0xff]
            %33 = vst [vmem:[%s23 + $0x20] sm:$0xff] %v32
            %v34 = vld [vmem:[%s22 + $0x38] sm:$0xff]
            %35 = vst [vmem:[%s23 + $0x28] sm:$0xff] %v34
          $region22: #{tpu_custom_call.1} parent=16 // loop_footer
            %s21 = sadd.s32 1, %s17
          $region23: #{tpu_custom_call.1} parent=16 // loop_footer_branch
            %16 = sbr.rel target = $region19
          $region24: #{tpu_custom_call.1} parent=16 // loop_exit
            _
        $region17: #{tpu_custom_call.1} parent=8 // pred_fallthru
          _
      $region9: #{tpu_custom_call.1} parent=4 // pred_fallthru
        _
      %60 = vnop
    $region5: #{tpu_custom_call.1} parent=1 // pred_fallthru
      _
    // Predicated region
    $region40: #{tpu_custom_call.1} parent=1 // pred_check
      _
    $region41: #{tpu_custom_call.1} parent=1 // pred_check_branch
      %62 = sbr.rel (0) target = $region43
    $region42: #{tpu_custom_call.1} parent=1 // pred_region
      _
    $region43: #{tpu_custom_call.1} parent=1 // pred_fallthru
      _
    %v63 = vld [vmem:[#allocation2] sm:$0xff]
    %v64 = vld [vmem:[#allocation2 + $0x8] sm:$0xff]
    %v65 = vld [vmem:[#allocation2 + $0x10] sm:$0xff]
    %v66 = vld [vmem:[#allocation2 + $0x18] sm:$0xff]
    %v67 = vld [vmem:[#allocation2 + $0x20] sm:$0xff]
    %v68 = vld [vmem:[#allocation2 + $0x28] sm:$0xff]
    %vm69 = vcmask 130048
    %70 = vst.msk [vmem:[#allocation3] sm:$0xff] %vm69, %v63
    %71 = vst.msk [vmem:[#allocation3 + $0x8] sm:$0xff] %vm69, %v64
    %72 = vst.msk [vmem:[#allocation3 + $0x10] sm:$0xff] %vm69, %v65
    %73 = vst.msk [vmem:[#allocation3 + $0x18] sm:$0xff] %vm69, %v66
    %74 = vst.msk [vmem:[#allocation3 + $0x20] sm:$0xff] %vm69, %v67
    %75 = vst.msk [vmem:[#allocation3 + $0x28] sm:$0xff] %vm69, %v68
    // Predicated region
    $region44: #{tpu_custom_call.1} parent=1 // pred_check
      _
    $region45: #{tpu_custom_call.1} parent=1 // pred_check_branch
      %77 = sbr.rel (0) target = $region47
    $region46: #{tpu_custom_call.1} parent=1 // pred_region
      %s79 = ssub.s32 768, 768
      %80 = vsyncadd [#allocation4], %s79
      %s81 = sshll.u32 [#allocation3], 4
      %s82 = int_to_ptr.vmem [resolvable:$true] %s81
      %87 = dma.vmem_to_hbm [thread:$0]  %s82, 768, %s1, [#allocation4], 128, 128, 8
    $region47: #{tpu_custom_call.1} parent=1 // pred_fallthru
      _
    // Predicated region
    $region48: #{tpu_custom_call.1} parent=1 // pred_check
      _
    $region49: #{tpu_custom_call.1} parent=1 // pred_check_branch
      %89 = sbr.rel (0) target = $region51
    $region50: #{tpu_custom_call.1} parent=1 // pred_region
      %90 = dma.done [#allocation4], 768
    $region51: #{tpu_custom_call.1} parent=1 // pred_fallthru
      _
    %91 = vsyncpa [#allocation4], 1

</llo_original>
